<compile_context>
chip_gen: v6e
topology: v6e:2x2x1
jax: 0.10.0
libtpu: 0.0.40
codegen_flags: <defaults>
</compile_context>

<pallas_src>
import jax
import jax.numpy as jnp
from jax.experimental import pallas as pl
from jax.experimental.pallas import tpu as pltpu

_LANE = 128
_SUBLANE = 8
_FALLBACK_VMEM_BUDGET = 48 * 1024 * 1024   # safe even on v7x (64 MiB physical)


def _round_up(v, m):
    return (v + m - 1) // m * m


def _pad2d(a, rows, cols):
    return jnp.pad(a, ((0, rows - a.shape[0]), (0, cols - a.shape[1])))


def _vmem_budget_bytes():
    """Generation-aware scoped-VMEM budget: ~75% of physical VMEM."""
    try:
        cap = int(pltpu.get_tpu_info().vmem_capacity_bytes)
        return (cap * 3) // 4
    except Exception:
        return _FALLBACK_VMEM_BUDGET


def _tiled_vmem_bytes(n_pad, tm, fin_p, hid_p, out_p, itemsize, resident):
    """Conservative VMEM footprint estimate for the two-phase tiled kernel."""
    b = 2 * tm * n_pad * itemsize                      # adj row tile (double-buffered)
    b += 2 * n_pad * fin_p * itemsize                  # x (conservatively 2x)
    b += 2 * (fin_p * hid_p + hid_p * out_p) * itemsize  # weights
    b += 2 * (hid_p + out_p) * 4                       # biases (f32)
    b += 2 * tm * out_p * 4                            # output tile (f32, 2x)
    b += n_pad * out_p * itemsize                      # s = h @ W2 scratch
    if resident:
        b += n_pad * n_pad * itemsize                  # adj VMEM scratch
    b += 4 * tm * (fin_p + 2 * hid_p + 2 * out_p)      # in-kernel f32 intermediates
    return b


# ---------------------------------------------------------------------------
# Fused two-phase kernel.  grid = (2, num_row_tiles).
#   phase 0: s[tile] = relu((adj_tile @ x) @ W1 + b1) @ W2    -> VMEM scratch
#            (resident variant also stashes adj_tile into an adj VMEM scratch)
#   phase 1: out[tile] = adj_tile @ s + b2
# ---------------------------------------------------------------------------
def _gcn_fused_tiled_kernel(x_ref, w1_ref, b1_ref, w2_ref, b2_ref, adj_ref,
                            o_ref, s_ref, *opt_adj_vmem):
    adj_resident = bool(opt_adj_vmem)   # trace-time Python branch
    p = pl.program_id(0)                # 0: build s, 1: produce output
    i = pl.program_id(1)                # adj row-tile index
    tm = adj_ref.shape[0]
    cdt = s_ref.dtype
    r0 = pl.multiple_of(i * tm, tm)

    @pl.when(p == 0)
    def _layer1():
        adj_t = adj_ref[...]
        # (adj_tile @ x) @ W1: the O(N^2) matmul runs at the (padded) input
        # feature width; f32 accumulation on the MXU.
        ax = jnp.dot(adj_t, x_ref[...], preferred_element_type=jnp.float32)
        s1 = jnp.dot(ax.astype(cdt), w1_ref[...],
                     preferred_element_type=jnp.float32)
        h_t = jnp.maximum(s1 + b1_ref[...], 0.0).astype(cdt)
        # dropout(p, training=False) == identity (eval mode).
        # Fold the layer-2 weight matmul into phase 0; scratch holds h @ W2.
        s_t = jnp.dot(h_t, w2_ref[...], preferred_element_type=jnp.float32)
        s_ref[pl.ds(r0, tm), :] = s_t.astype(cdt)
        if adj_resident:
            opt_adj_vmem[0][pl.ds(r0, tm), :] = adj_t

    @pl.when(p == 1)
    def _layer2():
        if adj_resident:
            adj_t = opt_adj_vmem[0][pl.ds(r0, tm), :]   # adj from VMEM (HBM read-once)
        else:
            adj_t = adj_ref[...]                        # adj re-streamed from HBM
        out = jnp.dot(adj_t, s_ref[...],
                      preferred_element_type=jnp.float32) + b2_ref[...]
        o_ref[...] = out.astype(o_ref.dtype)


def _gcn2_pallas_tiled(xp, adjp, w1p, b1p, w2p, b2p, tm, adj_resident,
                       vmem_limit):
    n_pad, fin_p = xp.shape
    hid_p = w1p.shape[1]
    out_p = w2p.shape[1]
    num_tiles = n_pad // tm
    itemsize = jnp.dtype(xp.dtype).itemsize

    adj_reads = 1 if adj_resident else 2
    flops = (2 * n_pad * n_pad * fin_p          # adj @ x
             + 2 * n_pad * fin_p * hid_p        # (.) @ W1
             + 2 * n_pad * hid_p * out_p        # h @ W2
             + 2 * n_pad * n_pad * out_p)       # adj @ s
    bytes_accessed = (itemsize * (xp.size + adj_reads * adjp.size
                                  + w1p.size + w2p.size)
                      + 4 * (n_pad * out_p + b1p.size + b2p.size))

    # adj index map: phase 0 streams row tile i; in the resident variant the
    # phase-1 index parks on block 0, so adj is DMA'd from HBM only once.
    if adj_resident:
        adj_map = lambda p, i: ((1 - p) * i, 0)
    else:
        adj_map = lambda p, i: (i, 0)

    scratch_shapes = [pltpu.VMEM((n_pad, out_p), xp.dtype)]   # s = h @ W2
    if adj_resident:
        scratch_shapes.append(pltpu.VMEM((n_pad, n_pad), adjp.dtype))

    grid_spec = pltpu.PrefetchScalarGridSpec(
        num_scalar_prefetch=0,
        grid=(2, num_tiles),
        in_specs=[
            pl.BlockSpec((n_pad, fin_p), lambda p, i: (0, 0)),   # x (resident)
            pl.BlockSpec((fin_p, hid_p), lambda p, i: (0, 0)),   # W1 (resident)
            pl.BlockSpec((1, hid_p), lambda p, i: (0, 0)),       # b1 (resident)
            pl.BlockSpec((hid_p, out_p), lambda p, i: (0, 0)),   # W2 (resident)
            pl.BlockSpec((1, out_p), lambda p, i: (0, 0)),       # b2 (resident)
            pl.BlockSpec((tm, n_pad), adj_map),                  # adj row tile
        ],
        # p*i parks the output buffer on block 0 during phase 0 (never written
        # there -> not flushed to HBM); every output block is written exactly
        # once, in phase 1, where the block index follows i (innermost axis).
        out_specs=pl.BlockSpec((tm, out_p), lambda p, i: (p * i, 0)),
        scratch_shapes=scratch_shapes,
    )
    return pl.pallas_call(
        _gcn_fused_tiled_kernel,
        out_shape=jax.ShapeDtypeStruct((n_pad, out_p), jnp.float32),
        grid_spec=grid_spec,
        compiler_params=pltpu.CompilerParams(
            # Phase 1 consumes VMEM scratch written by every phase-0 tile, so
            # the grid must run sequentially (no megacore split of this grid).
            dimension_semantics=("arbitrary", "arbitrary"),
            vmem_limit_bytes=vmem_limit,
        ),
        cost_estimate=pl.CostEstimate(flops=flops, transcendentals=0,
                                      bytes_accessed=bytes_accessed),
    )(xp, w1p, b1p, w2p, b2p, adjp)


class GCNPallas:
    """2-layer GCN matching the PyTorch module's forward (eval mode).

    compute_dtype defaults to bfloat16 (MXU inputs; f32 accumulation, f32
    biases and f32 output).  Pass jnp.float32 for tight numerics.
    """

    def __init__(self, input_dim, hidden_dim, output_dim, dropout, key,
                 compute_dtype=jnp.bfloat16):
        k1, k2, k3, k4 = jax.random.split(key, 4)
        s1 = 1.0 / jnp.sqrt(jnp.float32(input_dim))
        s2 = 1.0 / jnp.sqrt(jnp.float32(hidden_dim))
        # Logical (unpadded, f32) parameters — used by the pure-JAX reference.
        self.w1 = jax.random.uniform(k1, (input_dim, hidden_dim), jnp.float32, -s1, s1)
        self.b1 = jax.random.uniform(k2, (hidden_dim,), jnp.float32, -s1, s1)
        self.w2 = jax.random.uniform(k3, (hidden_dim, output_dim), jnp.float32, -s2, s2)
        self.b2 = jax.random.uniform(k4, (output_dim,), jnp.float32, -s2, s2)
        self.dropout = dropout                 # eval mode -> identity
        self.compute_dtype = compute_dtype
        self.input_dim, self.hidden_dim, self.output_dim = input_dim, hidden_dim, output_dim

        # Lane-padded (multiple-of-128) copies, padded ONCE here so every MXU
        # operand and the output store are lane-dense.  Zero padding is exact.
        self.fin_p = _round_up(input_dim, _LANE)
        self.hid_p = _round_up(hidden_dim, _LANE)
        self.out_p = _round_up(output_dim, _LANE)
        self.w1p = _pad2d(self.w1, self.fin_p, self.hid_p).astype(compute_dtype)
        self.w2p = _pad2d(self.w2, self.hid_p, self.out_p).astype(compute_dtype)
        self.b1p = _pad2d(self.b1.reshape(1, -1), 1, self.hid_p)   # bias stays f32
        self.b2p = _pad2d(self.b2.reshape(1, -1), 1, self.out_p)   # bias stays f32

    def __call__(self, x, adj, *, row_tile=512, force_streaming=False):
        n = x.shape[0]
        cdt = self.compute_dtype
        itemsize = jnp.dtype(cdt).itemsize
        budget = _vmem_budget_bytes()
        n8 = _round_up(n, _SUBLANE)

        # Largest row tile (<= row_tile, <= n8) whose streaming footprint fits
        # the generation-aware VMEM budget.
        tm = max(_SUBLANE, min(_round_up(row_tile, _SUBLANE), n8))
        while True:
            n_pad = _round_up(n, tm)
            stream_bytes = _tiled_vmem_bytes(n_pad, tm, self.fin_p, self.hid_p,
                                             self.out_p, itemsize, resident=False)
            if stream_bytes <= budget or tm <= _SUBLANE:
                break
            tm = max(_SUBLANE, _round_up(tm // 2, _SUBLANE))

        # adj-read-once (resident) variant whenever its adj VMEM scratch fits.
        resident_bytes = _tiled_vmem_bytes(n_pad, tm, self.fin_p, self.hid_p,
                                           self.out_p, itemsize, resident=True)
        adj_resident = (not force_streaming) and resident_bytes <= budget

        xp = _pad2d(x, n_pad, self.fin_p).astype(cdt)
        adjp = _pad2d(adj, n_pad, n_pad).astype(cdt)

        out = _gcn2_pallas_tiled(xp, adjp, self.w1p, self.b1p,
                                 self.w2p, self.b2p, tm, adj_resident, budget)
        return out[:n, :self.output_dim].astype(jnp.float32)


def _reference(x, adj, model):
    h = adj @ (x @ model.w1) + model.b1
    h = jnp.maximum(h, 0.0)
    return adj @ (h @ model.w2) + model.b2


if __name__ == "__main__":
    key = jax.random.PRNGKey(0)
    k_x, k_adj, k_params, k_x2, k_adj2 = jax.random.split(key, 5)

    def make_adj(k, n):
        # Synthetic symmetric-normalized adjacency (dense stand-in for sparse_coo).
        a = (jax.random.uniform(k, (n, n)) > 0.6).astype(jnp.float32)
        a = jnp.maximum(a, a.T) + jnp.eye(n, dtype=jnp.float32)
        d_inv_sqrt = 1.0 / jnp.sqrt(jnp.sum(a, axis=1))
        return a * d_inv_sqrt[:, None] * d_inv_sqrt[None, :]

    input_dim, hidden_dim, output_dim = 16, 32, 8

    # --- small graph, f32 ----------------------------------------------------
    n_nodes = 8
    x = jax.random.normal(k_x, (n_nodes, input_dim), jnp.float32)
    adj = make_adj(k_adj, n_nodes)
    model = GCNPallas(input_dim, hidden_dim, output_dim, dropout=0.5,
                      key=k_params, compute_dtype=jnp.float32)
    out = jax.block_until_ready(model(x, adj))
    ref = _reference(x, adj, model)
    assert out.shape == (n_nodes, output_dim)
    assert jnp.allclose(out, ref, atol=1e-4, rtol=1e-4), "small-graph mismatch"

    # --- larger graph, f32, multi-tile: adj-resident and streaming variants --
    n_big = 256
    x2 = jax.random.normal(k_x2, (n_big, input_dim), jnp.float32)
    adj2 = make_adj(k_adj2, n_big)
    ref2 = _reference(x2, adj2, model)
    out2 = jax.block_until_ready(model(x2, adj2, row_tile=64))
    assert out2.shape == (n_big, output_dim)
    assert jnp.allclose(out2, ref2, atol=1e-3, rtol=1e-3), "resident-path mismatch"
    out3 = jax.block_until_ready(model(x2, adj2, row_tile=64, force_streaming=True))
    assert jnp.allclose(out3, ref2, atol=1e-3, rtol=1e-3), "streaming-path mismatch"

    # --- small graph, default bf16 MXU inputs, f32 accumulation --------------
    model_bf16 = GCNPallas(input_dim, hidden_dim, output_dim, dropout=0.5,
                           key=k_params)
    out_bf16 = jax.block_until_ready(model_bf16(x, adj))
    assert out_bf16.shape == (n_nodes, output_dim)
    assert jnp.allclose(out_bf16, ref, atol=1e-1, rtol=1e-1), "bf16 mismatch"

    print("KERNEL_OK")
</pallas_src>

<mosaic_0001>
module attributes {stable_mosaic.version = 11 : i64} {
  func.func @_gcn_fused_tiled_kernel(%arg0: i32, %arg1: i32, %arg2: memref<8x128xf32, #tpu.memory_space<vmem>>, %arg3: memref<128x128xf32, #tpu.memory_space<vmem>>, %arg4: memref<1x128xf32, #tpu.memory_space<vmem>>, %arg5: memref<128x128xf32, #tpu.memory_space<vmem>>, %arg6: memref<1x128xf32, #tpu.memory_space<vmem>>, %arg7: memref<8x8xf32, #tpu.memory_space<vmem>>, %arg8: memref<8x128xf32, #tpu.memory_space<vmem>>, %arg9: memref<8x128xf32, #tpu.memory_space<vmem>>, %arg10: memref<8x8xf32, #tpu.memory_space<vmem>>) attributes {dimension_semantics = [#tpu.dimension_semantics<arbitrary>, #tpu.dimension_semantics<arbitrary>], iteration_bounds = array<i64: 2, 1>, scalar_prefetch = 0 : i64, scratch_operands = 2 : i64, tpu.core_type = #tpu.core_type<tc>, window_params = [{pipeline_mode = #tpu.pipeline_mode<synchronous>, transform_indices = @transform_0, window_bounds = array<i64: 8, 128>}, {pipeline_mode = #tpu.pipeline_mode<synchronous>, transform_indices = @transform_1, window_bounds = array<i64: 128, 128>}, {pipeline_mode = #tpu.pipeline_mode<synchronous>, transform_indices = @transform_2, window_bounds = array<i64: 1, 128>}, {pipeline_mode = #tpu.pipeline_mode<synchronous>, transform_indices = @transform_3, window_bounds = array<i64: 128, 128>}, {pipeline_mode = #tpu.pipeline_mode<synchronous>, transform_indices = @transform_4, window_bounds = array<i64: 1, 128>}, {transform_indices = @transform_5, window_bounds = array<i64: 8, 8>}, {transform_indices = @transform_6, window_bounds = array<i64: 8, 128>}]} {
    %c8_i32 = arith.constant 8 : i32
    %0 = arith.muli %arg1, %c8_i32 : i32
    %1 = tpu.assume_multiple %0, 8 : i32
    %c0_i32 = arith.constant 0 : i32
    %2 = arith.cmpi eq, %arg0, %c0_i32 : i32
    %3 = arith.extui %2 : i1 to i32
    %c0_i32_0 = arith.constant 0 : i32
    %4 = arith.cmpi ne, %3, %c0_i32_0 : i32
    scf.if %4 {
      %c0 = arith.constant 0 : index
      %c0_2 = arith.constant 0 : index
      %8 = vector.load %arg7[%c0, %c0_2] : memref<8x8xf32, #tpu.memory_space<vmem>>, vector<8x8xf32>
      %c0_3 = arith.constant 0 : index
      %c0_4 = arith.constant 0 : index
      %9 = vector.load %arg2[%c0_3, %c0_4] : memref<8x128xf32, #tpu.memory_space<vmem>>, vector<8x128xf32>
      %cst = arith.constant dense<0.000000e+00> : vector<8x128xf32>
      %10 = tpu.matmul %8, %9, %cst {dimension_numbers = #tpu.dot_dimension_numbers<[1], [0], [0], [1], [0, 0, 1, 1], [], []>} : vector<8x8xf32>, vector<8x128xf32>, vector<8x128xf32> -> vector<8x128xf32>
      %c0_5 = arith.constant 0 : index
      %c0_6 = arith.constant 0 : index
      %11 = vector.load %arg3[%c0_5, %c0_6] : memref<128x128xf32, #tpu.memory_space<vmem>>, vector<128x128xf32>
      %cst_7 = arith.constant dense<0.000000e+00> : vector<8x128xf32>
      %12 = tpu.matmul %10, %11, %cst_7 {dimension_numbers = #tpu.dot_dimension_numbers<[1], [0], [0], [1], [0, 0, 1, 1], [], []>} : vector<8x128xf32>, vector<128x128xf32>, vector<8x128xf32> -> vector<8x128xf32>
      %c0_8 = arith.constant 0 : index
      %c0_9 = arith.constant 0 : index
      %13 = vector.load %arg4[%c0_8, %c0_9] : memref<1x128xf32, #tpu.memory_space<vmem>>, vector<1x128xf32>
      %14 = vector.broadcast %13 : vector<1x128xf32> to vector<8x128xf32>
      %15 = arith.addf %12, %14 : vector<8x128xf32>
      %cst_10 = arith.constant 0.000000e+00 : f32
      %16 = vector.broadcast %cst_10 : f32 to vector<8x128xf32>
      %17 = arith.maximumf %15, %16 : vector<8x128xf32>
      %c0_11 = arith.constant 0 : index
      %c0_12 = arith.constant 0 : index
      %18 = vector.load %arg5[%c0_11, %c0_12] : memref<128x128xf32, #tpu.memory_space<vmem>>, vector<128x128xf32>
      %cst_13 = arith.constant dense<0.000000e+00> : vector<8x128xf32>
      %19 = tpu.matmul %17, %18, %cst_13 {dimension_numbers = #tpu.dot_dimension_numbers<[1], [0], [0], [1], [0, 0, 1, 1], [], []>} : vector<8x128xf32>, vector<128x128xf32>, vector<8x128xf32> -> vector<8x128xf32>
      %20 = arith.index_cast %1 : i32 to index
      %c0_14 = arith.constant 0 : index
      %21 = vector.load %arg9[%20, %c0_14] : memref<8x128xf32, #tpu.memory_space<vmem>>, vector<8x128xf32>
      tpu.vector_store %arg9[%20, %c0_14], %19 {strides = array<i32>} : memref<8x128xf32, #tpu.memory_space<vmem>>, vector<8x128xf32>,
      %22 = arith.index_cast %1 : i32 to index
      %c0_15 = arith.constant 0 : index
      %23 = vector.load %arg10[%22, %c0_15] : memref<8x8xf32, #tpu.memory_space<vmem>>, vector<8x8xf32>
      tpu.vector_store %arg10[%22, %c0_15], %8 {strides = array<i32>} : memref<8x8xf32, #tpu.memory_space<vmem>>, vector<8x8xf32>,
    } else {
    }
    %c1_i32 = arith.constant 1 : i32
    %5 = arith.cmpi eq, %arg0, %c1_i32 : i32
    %6 = arith.extui %5 : i1 to i32
    %c0_i32_1 = arith.constant 0 : i32
    %7 = arith.cmpi ne, %6, %c0_i32_1 : i32
    scf.if %7 {
      %8 = arith.index_cast %1 : i32 to index
      %c0 = arith.constant 0 : index
      %9 = vector.load %arg10[%8, %c0] : memref<8x8xf32, #tpu.memory_space<vmem>>, vector<8x8xf32>
      %c0_2 = arith.constant 0 : index
      %c0_3 = arith.constant 0 : index
      %10 = vector.load %arg9[%c0_2, %c0_3] : memref<8x128xf32, #tpu.memory_space<vmem>>, vector<8x128xf32>
      %cst = arith.constant dense<0.000000e+00> : vector<8x128xf32>
      %11 = tpu.matmul %9, %10, %cst {dimension_numbers = #tpu.dot_dimension_numbers<[1], [0], [0], [1], [0, 0, 1, 1], [], []>} : vector<8x8xf32>, vector<8x128xf32>, vector<8x128xf32> -> vector<8x128xf32>
      %c0_4 = arith.constant 0 : index
      %c0_5 = arith.constant 0 : index
      %12 = vector.load %arg6[%c0_4, %c0_5] : memref<1x128xf32, #tpu.memory_space<vmem>>, vector<1x128xf32>
      %13 = vector.broadcast %12 : vector<1x128xf32> to vector<8x128xf32>
      %14 = arith.addf %11, %13 : vector<8x128xf32>
      %c0_6 = arith.constant 0 : index
      %c0_7 = arith.constant 0 : index
      %15 = vector.load %arg8[%c0_6, %c0_7] : memref<8x128xf32, #tpu.memory_space<vmem>>, vector<8x128xf32>
      tpu.vector_store %arg8[%c0_6, %c0_7], %14 {strides = array<i32>} : memref<8x128xf32, #tpu.memory_space<vmem>>, vector<8x128xf32>,
    } else {
    }
    return
  }
  func.func @transform_0(%arg0: i32, %arg1: i32) -> (i32, i32) {
    %c0_i32 = arith.constant 0 : i32
    %c0_i32_0 = arith.constant 0 : i32
    %c0_i32_1 = arith.constant 0 : i32
    return %c0_i32, %c0_i32_0 : i32, i32
  }
  func.func @transform_1(%arg0: i32, %arg1: i32) -> (i32, i32) {
    %c0_i32 = arith.constant 0 : i32
    %c0_i32_0 = arith.constant 0 : i32
    %c0_i32_1 = arith.constant 0 : i32
    return %c0_i32, %c0_i32_0 : i32, i32
  }
  func.func @transform_2(%arg0: i32, %arg1: i32) -> (i32, i32) {
    %c0_i32 = arith.constant 0 : i32
    %c0_i32_0 = arith.constant 0 : i32
    %c0_i32_1 = arith.constant 0 : i32
    return %c0_i32, %c0_i32_0 : i32, i32
  }
  func.func @transform_3(%arg0: i32, %arg1: i32) -> (i32, i32) {
    %c0_i32 = arith.constant 0 : i32
    %c0_i32_0 = arith.constant 0 : i32
    %c0_i32_1 = arith.constant 0 : i32
    return %c0_i32, %c0_i32_0 : i32, i32
  }
  func.func @transform_4(%arg0: i32, %arg1: i32) -> (i32, i32) {
    %c0_i32 = arith.constant 0 : i32
    %c0_i32_0 = arith.constant 0 : i32
    %c0_i32_1 = arith.constant 0 : i32
    return %c0_i32, %c0_i32_0 : i32, i32
  }
  func.func @transform_5(%arg0: i32, %arg1: i32) -> (i32, i32) {
    %c1_i32 = arith.constant 1 : i32
    %0 = arith.subi %c1_i32, %arg0 : i32
    %1 = arith.muli %0, %arg1 : i32
    %c0_i32 = arith.constant 0 : i32
    %c0_i32_0 = arith.constant 0 : i32
    return %1, %c0_i32 : i32, i32
  }
  func.func @transform_6(%arg0: i32, %arg1: i32) -> (i32, i32) {
    %0 = arith.muli %arg0, %arg1 : i32
    %c0_i32 = arith.constant 0 : i32
    %c0_i32_0 = arith.constant 0 : i32
    return %0, %c0_i32 : i32, i32
  }
}

</mosaic_0001>

<llo_original>
// kernel: tpu_custom_call.1
$region0: #{tpu_custom_call.1}
  #allocation0 [shape = 'u32[]', space=smem, size = 0x4, offset = 0x4, fixed_abs, tag = 'smem constant byte address 0x4 - core index']
  #allocation1 [shape = 'u32[144,128]{1,0:T(1,128)}', space=vmem, size = 0x12000, scoped, tag = 'internal scratch']
  #allocation2 [shape = 'f32[8,128]{1,0:T(8,128)}', space=vmem, size = 0x1000, scoped, tag = 'scratch operand']
  #allocation3 [shape = 'f32[8,8]{1,0:T(8,128)}', space=vmem, size = 0x1000, scoped, tag = 'scratch operand']
  %s0 = inlined_call_operand.hbm [shape: f32[8,128], index: 0, kind: input, shape index: {}]
  %s1 = inlined_call_operand.hbm [shape: f32[128,128], index: 1, kind: input, shape index: {}]
  %s2 = inlined_call_operand.vmem [shape: f32[1,128], index: 2, kind: input, shape index: {}]
  %s3 = inlined_call_operand.hbm [shape: f32[128,128], index: 3, kind: input, shape index: {}]
  %s4 = inlined_call_operand.hbm [shape: f32[1,128], index: 4, kind: input, shape index: {}]
  %s5 = inlined_call_operand.vmem [shape: f32[8,8], index: 5, kind: input, shape index: {}]
  %s6 = inlined_call_operand.hbm [shape: f32[8,128], index: 6, kind: output, shape index: {}]
  %s7 = sld [smem:[#allocation0]]
  $region81: #{tpu_custom_call.1} parent=0
    _
  %s9 = ssub.s32 1, %s7
  %s10 = scalar_select 0, %s9, %s7
  $region1: #{tpu_custom_call.1} parent=0
    #allocation4 [shape = 'u8[4096]{0}', space=vmem, size = 0x1000, scoped, tag = 'input window, operand 0, single buffered']
    #allocation5 [shape = 's32[2]{0}', space=sflag, size = 0x8, scoped, tag = 'scoped memory for tpu_custom_call.1']
    #allocation6 [shape = 's32[2]{0}', space=sflag, size = 0x8, scoped, tag = 'scoped memory for tpu_custom_call.1']
    #allocation7 [shape = 'u8[65536]{0}', space=vmem, size = 0x10000, scoped, tag = 'input window, operand 1, single buffered']
    #allocation8 [shape = 's32[1]{0}', space=sflag, size = 0x4, scoped, tag = 'scoped memory for tpu_custom_call.1']
    #allocation9 [shape = 'u8[65536]{0}', space=vmem, size = 0x10000, scoped, tag = 'input window, operand 3, single buffered']
    #allocation10 [shape = 'u8[512]{0}', space=vmem, size = 0x400, scoped, tag = 'input window, operand 4, single buffered']
    #allocation11 [shape = 's32[1]{0}', space=sflag, size = 0x4, scoped, tag = 'scoped memory for tpu_custom_call.1']
    #allocation12 [shape = 'u8[8192]{0}', space=vmem, size = 0x2000, scoped, tag = 'output window, operand 0']
    %11 = vsyncpa [#allocation5], 0
    %12 = vsyncpa [#allocation8], 0
    %13 = vsyncpa [#allocation11], 0
    %14 = vsyncpa [#allocation6], 0
    %s15 = scalar_lea.sflag [#allocation6], 1
    %16 = vsyncpa %s15, 0
    loop: start=0, step=1, limit=4
    $region2: #{tpu_custom_call.1} parent=1 // loop_pre_header
      _
    $region3: #{tpu_custom_call.1} parent=1 // loop_header
      %s18 = sphi 0, %s22
      %p19 = scmp.ge.s32.totalorder %s18, 4
      %s25 = sphi 0, %s37
      %s26 = sphi 0, %s33
      %s27 = sphi 0, %s25
      %s28 = sphi 0, %s26
      %s29 = sphi 0, %s27
      %s30 = sphi 0, %s28
      %s38 = sphi 0, %s38
      %s40 = sphi 0, %s38
      %s41 = sphi 0, %s40
      %s55 = sphi 0, %s41
      %s59 = sphi 0, %s59
      %s61 = sphi 0, %s59
      %s62 = sphi 0, %s61
      %s76 = sphi 0, %s62
      %s80 = sphi 0, %s80
      %s82 = sphi 0, %s80
      %s83 = sphi 0, %s82
      %s97 = sphi 0, %s83
      %s101 = sphi 0, %s101
      %s103 = sphi 0, %s101
      %s104 = sphi 0, %s103
      %s118 = sphi 0, %s104
      %s122 = sphi 0, %s122
      %s124 = sphi 0, %s122
      %s125 = sphi 0, %s124
      %s139 = sphi 0, %s125
      %s149 = sphi 0, %s151
      %s152 = sphi 0, %s149
      %s153 = sphi 0, %s152
      %s169 = sphi 0, %s153
      %s177 = sphi 0, %s179
      %s180 = sphi 0, %s177
      %s181 = sphi 0, %s180
      %s197 = sphi 0, %s181
    $region4: #{tpu_custom_call.1} parent=1 // loop_header_branch
      %21 = sbr.rel (%p19) target = $region8
    $region5: #{tpu_custom_call.1} parent=1 // loop_body
      %s23 = ssub.s32 %s18, 1
      %s24 = ssub.s32 %s18, 2
      %s31 = sadd.s32 1, %s26
      %p32 = scmp.ge.s32.totalorder %s31, 1
      %s33 = scalar_select %p32, 0, %s31
      %s34 = sadd.s32 1, %s25
      %s35 = scalar_select %p32, %s34, %s25
      %p36 = scmp.ge.s32.totalorder %s35, 2
      %s37 = scalar_select %p36, 0, %s35
      %s39 = sadd.s32 %s38, 1
      %p42 = scmp.eq.s32.totalorder %s18, 1
      %p43 = scmp.ne.s32.totalorder %s38, %s40
      %p44 = scmp.eq.s32.totalorder %s18, 0
      %p45 = por %p43, %p44
      %p46 = scmp.ne.s32.totalorder %s38, %s40
      %p47 = scmp.eq.s32.totalorder %s23, 1
      %p48 = por %p46, %p47
      %p49 = scmp.ne.s32.totalorder %s40, %s41
      %p50 = scmp.eq.s32.totalorder %s23, 0
      %p51 = por %p49, %p50
      %p52 = scmp.ne.s32.totalorder %s40, %s41
      %p53 = scmp.eq.s32.totalorder %s24, 1
      %p54 = por %p52, %p53
      %p56 = scmp.ne.s32.totalorder %s41, %s55
      %p57 = scmp.eq.s32.totalorder %s24, 0
      %p58 = por %p56, %p57
      %s60 = sadd.s32 %s59, 1
      %p63 = scmp.eq.s32.totalorder %s18, 1
      %p64 = scmp.ne.s32.totalorder %s59, %s61
      %p65 = scmp.eq.s32.totalorder %s18, 0
      %p66 = por %p64, %p65
      %p67 = scmp.ne.s32.totalorder %s59, %s61
      %p68 = scmp.eq.s32.totalorder %s23, 1
      %p69 = por %p67, %p68
      %p70 = scmp.ne.s32.totalorder %s61, %s62
      %p71 = scmp.eq.s32.totalorder %s23, 0
      %p72 = por %p70, %p71
      %p73 = scmp.ne.s32.totalorder %s61, %s62
      %p74 = scmp.eq.s32.totalorder %s24, 1
      %p75 = por %p73, %p74
      %p77 = scmp.ne.s32.totalorder %s62, %s76
      %p78 = scmp.eq.s32.totalorder %s24, 0
      %p79 = por %p77, %p78
      %s81 = sadd.s32 %s80, 1
      %p84 = scmp.eq.s32.totalorder %s18, 1
      %p85 = scmp.ne.s32.totalorder %s80, %s82
      %p86 = scmp.eq.s32.totalorder %s18, 0
      %p87 = por %p85, %p86
      %p88 = scmp.ne.s32.totalorder %s80, %s82
      %p89 = scmp.eq.s32.totalorder %s23, 1
      %p90 = por %p88, %p89
      %p91 = scmp.ne.s32.totalorder %s82, %s83
      %p92 = scmp.eq.s32.totalorder %s23, 0
      %p93 = por %p91, %p92
      %p94 = scmp.ne.s32.totalorder %s82, %s83
      %p95 = scmp.eq.s32.totalorder %s24, 1
      %p96 = por %p94, %p95
      %p98 = scmp.ne.s32.totalorder %s83, %s97
      %p99 = scmp.eq.s32.totalorder %s24, 0
      %p100 = por %p98, %p99
      %s102 = sadd.s32 %s101, 1
      %p105 = scmp.eq.s32.totalorder %s18, 1
      %p106 = scmp.ne.s32.totalorder %s101, %s103
      %p107 = scmp.eq.s32.totalorder %s18, 0
      %p108 = por %p106, %p107
      %p109 = scmp.ne.s32.totalorder %s101, %s103
      %p110 = scmp.eq.s32.totalorder %s23, 1
      %p111 = por %p109, %p110
      %p112 = scmp.ne.s32.totalorder %s103, %s104
      %p113 = scmp.eq.s32.totalorder %s23, 0
      %p114 = por %p112, %p113
      %p115 = scmp.ne.s32.totalorder %s103, %s104
      %p116 = scmp.eq.s32.totalorder %s24, 1
      %p117 = por %p115, %p116
      %p119 = scmp.ne.s32.totalorder %s104, %s118
      %p120 = scmp.eq.s32.totalorder %s24, 0
      %p121 = por %p119, %p120
      %s123 = sadd.s32 %s122, 1
      %p126 = scmp.eq.s32.totalorder %s18, 1
      %p127 = scmp.ne.s32.totalorder %s122, %s124
      %p128 = scmp.eq.s32.totalorder %s18, 0
      %p129 = por %p127, %p128
      %p130 = scmp.ne.s32.totalorder %s122, %s124
      %p131 = scmp.eq.s32.totalorder %s23, 1
      %p132 = por %p130, %p131
      %p133 = scmp.ne.s32.totalorder %s124, %s125
      %p134 = scmp.eq.s32.totalorder %s23, 0
      %p135 = por %p133, %p134
      %p136 = scmp.ne.s32.totalorder %s124, %s125
      %p137 = scmp.eq.s32.totalorder %s24, 1
      %p138 = por %p136, %p137
      %p140 = scmp.ne.s32.totalorder %s125, %s139
      %p141 = scmp.eq.s32.totalorder %s24, 0
      %p142 = por %p140, %p141
      %s143 = ssub.s32 1, %s25
      %s144 = smul.u32 %s143, %s26
      %s145 = ssub.s32 1, %s37
      %s146 = smul.u32 %s145, %s33
      %s147 = ssub.s32 %s144, %s146
      %p148 = scmp.eq.s32.totalorder %s147, 0
      %s150 = sadd.s32 %s149, 1
      %s151 = scalar_select %p148, %s149, %s150
      %p154 = pneg %p148
      %p155 = scmp.eq.s32.totalorder %s18, 1
      %p156 = por %p154, %p155
      %p157 = scmp.ne.s32.totalorder %s149, %s152
      %p158 = scmp.eq.s32.totalorder %s18, 0
      %p159 = por %p157, %p158
      %p160 = scmp.ne.s32.totalorder %s149, %s152
      %p161 = scmp.eq.s32.totalorder %s23, 1
      %p162 = por %p160, %p161
      %p163 = scmp.ne.s32.totalorder %s152, %s153
      %p164 = scmp.eq.s32.totalorder %s23, 0
      %p165 = por %p163, %p164
      %p166 = scmp.ne.s32.totalorder %s152, %s153
      %p167 = scmp.eq.s32.totalorder %s24, 1
      %p168 = por %p166, %p167
      %p170 = scmp.ne.s32.totalorder %s153, %s169
      %p171 = scmp.eq.s32.totalorder %s24, 0
      %p172 = por %p170, %p171
      %s173 = smul.u32 %s25, %s26
      %s174 = smul.u32 %s37, %s33
      %s175 = ssub.s32 %s173, %s174
      %p176 = scmp.eq.s32.totalorder %s175, 0
      %s178 = sadd.s32 %s177, 1
      %s179 = scalar_select %p176, %s177, %s178
      %p182 = pneg %p176
      %p183 = scmp.eq.s32.totalorder %s18, 1
      %p184 = por %p182, %p183
      %p185 = scmp.ne.s32.totalorder %s177, %s180
      %p186 = scmp.eq.s32.totalorder %s18, 0
      %p187 = por %p185, %p186
      %p188 = scmp.ne.s32.totalorder %s177, %s180
      %p189 = scmp.eq.s32.totalorder %s23, 1
      %p190 = por %p188, %p189
      %p191 = scmp.ne.s32.totalorder %s180, %s181
      %p192 = scmp.eq.s32.totalorder %s23, 0
      %p193 = por %p191, %p192
      %p194 = scmp.ne.s32.totalorder %s180, %s181
      %p195 = scmp.eq.s32.totalorder %s24, 1
      %p196 = por %p194, %p195
      %p198 = scmp.ne.s32.totalorder %s181, %s197
      %p199 = scmp.eq.s32.totalorder %s24, 0
      %p200 = por %p198, %p199
      %p201 = scmp.le.s32.totalorder 1, %s18
      %p202 = scmp.lt.s32.totalorder %s18, 3
      %p203 = pnand %p201, %p202
      %p204 = pneg %p203
      // Predicated region
      $region9: #{tpu_custom_call.1} parent=5 // pred_check
        _
      $region10: #{tpu_custom_call.1} parent=5 // pred_check_branch
        %206 = sbr.rel (%p203) target = $region12
      $region11: #{tpu_custom_call.1} parent=5 // pred_region
        %s207 = ssub.s32 %s18, 1
        // Predicated region
        $region13: #{tpu_custom_call.1} parent=11 // pred_check
          %p208 = pneg %p51
        $region14: #{tpu_custom_call.1} parent=11 // pred_check_branch
          %210 = sbr.rel (%p208) target = $region16
        $region15: #{tpu_custom_call.1} parent=11 // pred_region
          %s212 = ssub.s32 128, 128
          %213 = vsyncadd [#allocation5], %s212
          %s215 = sshll.u32 [#allocation4], 4
          %s216 = int_to_ptr.vmem [resolvable:$true] %s215
          %218 = dma.hbm_to_vmem [thread:$0]  %s0, 128, %s216, [#allocation5]
        $region16: #{tpu_custom_call.1} parent=11 // pred_fallthru
          _
        // Predicated region
        $region17: #{tpu_custom_call.1} parent=11 // pred_check
          %p219 = pneg %p72
        $region18: #{tpu_custom_call.1} parent=11 // pred_check_branch
          %221 = sbr.rel (%p219) target = $region20
        $region19: #{tpu_custom_call.1} parent=11 // pred_region
          %s223 = ssub.s32 2048, 2048
          %224 = vsyncadd [#allocation8], %s223
          %s225 = sshll.u32 [#allocation7], 4
          %s226 = int_to_ptr.vmem [resolvable:$true] %s225
          %231 = dma.hbm_to_vmem [thread:$0]  %s1, 2048, %s226, [#allocation8], 128, 128, 8
        $region20: #{tpu_custom_call.1} parent=11 // pred_fallthru
          _
        // Predicated region
        $region21: #{tpu_custom_call.1} parent=11 // pred_check
          %p232 = pneg %p93
        $region22: #{tpu_custom_call.1} parent=11 // pred_check_branch
          %234 = sbr.rel (%p232) target = $region24
        $region23: #{tpu_custom_call.1} parent=11 // pred_region
          _
        $region24: #{tpu_custom_call.1} parent=11 // pred_fallthru
          _
        // Predicated region
        $region25: #{tpu_custom_call.1} parent=11 // pred_check
          %p235 = pneg %p114
        $region26: #{tpu_custom_call.1} parent=11 // pred_check_branch
          %237 = sbr.rel (%p235) target = $region28
        $region27: #{tpu_custom_call.1} parent=11 // pred_region
          %s239 = ssub.s32 2048, 2048
          %240 = vsyncadd [#allocation8], %s239
          %s241 = sshll.u32 [#allocation9], 4
          %s242 = int_to_ptr.vmem [resolvable:$true] %s241
          %247 = dma.hbm_to_vmem [thread:$0]  %s3, 2048, %s242, [#allocation8], 128, 128, 8
        $region28: #{tpu_custom_call.1} parent=11 // pred_fallthru
          _
        // Predicated region
        $region29: #{tpu_custom_call.1} parent=11 // pred_check
          %p248 = pneg %p135
        $region30: #{tpu_custom_call.1} parent=11 // pred_check_branch
          %250 = sbr.rel (%p248) target = $region32
        $region31: #{tpu_custom_call.1} parent=11 // pred_region
          %s252 = ssub.s32 16, 16
          %253 = vsyncadd [#allocation11], %s252
          %s255 = sshll.u32 [#allocation10], 4
          %s256 = int_to_ptr.vmem [resolvable:$true] %s255
          %258 = dma.hbm_to_vmem [thread:$0]  %s4, 16, %s256, [#allocation11]
        $region32: #{tpu_custom_call.1} parent=11 // pred_fallthru
          _
      $region12: #{tpu_custom_call.1} parent=5 // pred_fallthru
        _
      %p259 = scmp.lt.s32.totalorder %s18, 2
      // Predicated region
      $region33: #{tpu_custom_call.1} parent=5 // pred_check
        %p260 = pneg %p259
      $region34: #{tpu_custom_call.1} parent=5 // pred_check_branch
        %262 = sbr.rel (%p260) target = $region36
      $region35: #{tpu_custom_call.1} parent=5 // pred_region
        // Predicated region
        $region37: #{tpu_custom_call.1} parent=35 // pred_check
          %p263 = pneg %p159
        $region38: #{tpu_custom_call.1} parent=35 // pred_check_branch
          %265 = sbr.rel (%p263) target = $region40
        $region39: #{tpu_custom_call.1} parent=35 // pred_region
          %s266 = ssub.s32 1, %s25
          %s267 = smul.u32 %s266, %s26
          %p268 = scmp.lt.s32.totalorder %s267, 0
          %s269 = scalar_select %p268, %s267, 0
          %s270 = smul.addr %s269, 8
          %s271 = scalar_lea.vmem %s5, %s270
          %s272 = ssub.s32 1, %s25
          %s273 = smul.u32 %s272, %s26
        $region40: #{tpu_custom_call.1} parent=35 // pred_fallthru
          _
      $region36: #{tpu_custom_call.1} parent=5 // pred_fallthru
        _
      %p274 = scmp.le.s32.totalorder 1, %s18
      %p275 = scmp.lt.s32.totalorder %s18, 3
      %p276 = pnand %p274, %p275
      %p277 = pneg %p276
      // Predicated region
      $region41: #{tpu_custom_call.1} parent=5 // pred_check
        _
      $region42: #{tpu_custom_call.1} parent=5 // pred_check_branch
        %279 = sbr.rel (%p276) target = $region44
      $region43: #{tpu_custom_call.1} parent=5 // pred_region
        %s280 = ssub.s32 %s18, 1
        // Predicated region
        $region45: #{tpu_custom_call.1} parent=43 // pred_check
          %p281 = pneg %p51
        $region46: #{tpu_custom_call.1} parent=43 // pred_check_branch
          %283 = sbr.rel (%p281) target = $region48
        $region47: #{tpu_custom_call.1} parent=43 // pred_region
          %284 = dma.done [#allocation5], 128
        $region48: #{tpu_custom_call.1} parent=43 // pred_fallthru
          _
        // Predicated region
        $region49: #{tpu_custom_call.1} parent=43 // pred_check
          %p285 = pneg %p72
        $region50: #{tpu_custom_call.1} parent=43 // pred_check_branch
          %287 = sbr.rel (%p285) target = $region52
        $region51: #{tpu_custom_call.1} parent=43 // pred_region
          %288 = dma.done [#allocation8], 2048
        $region52: #{tpu_custom_call.1} parent=43 // pred_fallthru
          _
        // Predicated region
        $region53: #{tpu_custom_call.1} parent=43 // pred_check
          %p289 = pneg %p114
        $region54: #{tpu_custom_call.1} parent=43 // pred_check_branch
          %291 = sbr.rel (%p289) target = $region56
        $region55: #{tpu_custom_call.1} parent=43 // pred_region
          %292 = dma.done [#allocation8], 2048
        $region56: #{tpu_custom_call.1} parent=43 // pred_fallthru
          _
        // Predicated region
        $region57: #{tpu_custom_call.1} parent=43 // pred_check
          %p293 = pneg %p135
        $region58: #{tpu_custom_call.1} parent=43 // pred_check_branch
          %295 = sbr.rel (%p293) target = $region60
        $region59: #{tpu_custom_call.1} parent=43 // pred_region
          %296 = dma.done [#allocation11], 16
        $region60: #{tpu_custom_call.1} parent=43 // pred_fallthru
          _
        %p297 = pneg %p51
        %p298 = pneg %p48
        %p299 = pneg %p72
        %p300 = pneg %p69
        %p301 = pneg %p93
        %p302 = pneg %p90
        %p303 = pneg %p114
        %p304 = pneg %p111
        %p305 = pneg %p135
        %p306 = pneg %p132
        %s307 = ssub.s32 1, %s27
        %s308 = smul.u32 %s307, %s28
        %p309 = scmp.lt.s32.totalorder %s308, 0
        %s310 = scalar_select %p309, %s308, 0
        %s311 = smul.addr %s310, 8
        %s312 = scalar_lea.vmem %s5, %s311
        %p313 = pneg %p165
        %p314 = pneg %p162
        %p315 = pneg %p193
        %p316 = pneg %p190
        %s317 = sand.u32 %s180, 1
        %s318 = scalar_lea.sflag [#allocation6], %s317
        %s319 = sand.u32 %s180, 1
        %s320 = smul.addr %s319, 8
        %s321 = scalar_lea.vmem [#allocation12], %s320
        %s322 = ssub.s32 1, %s27
        %s323 = smul.u32 %s322, %s28
        %p324 = scmp.lt.s32.totalorder %s323, 0
        %s325 = scalar_select %p324, %s323, 0
        %s326 = smul.addr %s325, 8
        %s327 = scalar_lea.vmem %s5, %s326
        %s328 = ssub.s32 1, %s27
        %s329 = smul.u32 %s328, %s28
        %s330 = smul.u32 %s27, %s28
        %s331 = smul.u32 %s28, 8
        %p332 = scmp.eq.s32.totalorder %s27, 0
        // Predicated region
        $region61: #{tpu_custom_call.1} parent=43 // pred_check
          %p333 = pneg %p332
        $region62: #{tpu_custom_call.1} parent=43 // pred_check_branch
          %335 = sbr.rel (%p333) target = $region64
        $region63: #{tpu_custom_call.1} parent=43 // pred_region
          %v336 = vld [vmem:[%s327] sm:$0xff]
          %v337 = vld [vmem:[#allocation4] sm:$0xff]
          %vm338 = vcmask 64512
          %v340 = vsel %vm338, %v336, 0
          %342 = vmatprep.subr.mxu0 0.0
          %343 = vmatpush1.msra.mxu0 0.0
          %344 = vmatprep.subr.mxu0 0.0
          %345 = vmatpush1.msra.mxu0 0.0
          %346 = vmatprep.subr.mxu0 0.0
          %347 = vmatpush1.msra.mxu0 0.0
          %348 = vmatprep.subr.mxu0 0.0
          %349 = vmatpush1.msra.mxu0 0.0
          %350 = vmatprep.subr.mxu0 0.0
          %351 = vmatpush1.msra.mxu0 0.0
          %352 = vmatprep.subr.mxu0 0.0
          %353 = vmatpush1.msra.mxu0 0.0
          %354 = vmatprep.subr.mxu0 0.0
          %355 = vmatpush1.msra.mxu0 0.0
          %356 = vmatprep.subr.mxu0 0.0
          %357 = vmatpush1.msra.mxu0 0.0
          %358 = vmatprep.subr.mxu0 0.0
          %359 = vmatpush1.msra.mxu0 0.0
          %360 = vmatprep.subr.mxu0 0.0
          %361 = vmatpush1.msra.mxu0 0.0
          %362 = vmatprep.subr.mxu0 0.0
          %363 = vmatpush1.msra.mxu0 0.0
          %364 = vmatprep.subr.mxu0 0.0
          %365 = vmatpush1.msra.mxu0 0.0
          %366 = vmatprep.subr.mxu0 0.0
          %367 = vmatpush1.msra.mxu0 0.0
          %368 = vmatprep.subr.mxu0 0.0
          %369 = vmatpush1.msra.mxu0 0.0
          %370 = vmatprep.subr.mxu0 0.0
          %371 = vmatpush1.msra.mxu0 0.0
          %372 = vmatprep.subr.mxu0 0.0
          %373 = vmatpush1.msra.mxu0 %v337
          %374 = vmatprep.subr.mxu0 0.0
          %375 = vmatpush2.msra.mxu0 0.0
          %376 = vmatprep.subr.mxu0 0.0
          %377 = vmatpush2.msra.mxu0 0.0
          %378 = vmatprep.subr.mxu0 0.0
          %379 = vmatpush2.msra.mxu0 0.0
          %380 = vmatprep.subr.mxu0 0.0
          %381 = vmatpush2.msra.mxu0 0.0
          %382 = vmatprep.subr.mxu0 0.0
          %383 = vmatpush2.msra.mxu0 0.0
          %384 = vmatprep.subr.mxu0 0.0
          %385 = vmatpush2.msra.mxu0 0.0
          %386 = vmatprep.subr.mxu0 0.0
          %387 = vmatpush2.msra.mxu0 0.0
          %388 = vmatprep.subr.mxu0 0.0
          %389 = vmatpush2.msra.mxu0 0.0
          %390 = vmatprep.subr.mxu0 0.0
          %391 = vmatpush2.msra.mxu0 0.0
          %392 = vmatprep.subr.mxu0 0.0
          %393 = vmatpush2.msra.mxu0 0.0
          %394 = vmatprep.subr.mxu0 0.0
          %395 = vmatpush2.msra.mxu0 0.0
          %396 = vmatprep.subr.mxu0 0.0
          %397 = vmatpush2.msra.mxu0 0.0
          %398 = vmatprep.subr.mxu0 0.0
          %399 = vmatpush2.msra.mxu0 0.0
          %400 = vmatprep.subr.mxu0 0.0
          %401 = vmatpush2.msra.mxu0 0.0
          %402 = vmatprep.subr.mxu0 0.0
          %403 = vmatpush2.msra.mxu0 0.0
          %404 = vmatprep.subr.mxu0 0.0
          %405 = vmatpush2.msra.mxu0 0.0
          %406 = vmatprep.mubr.f32.mxu0 0.0
          %407 = vmatmul.mubr.f32.gmra.mxu0 %v340
          %v408 = vpop.f32.mrf.mxu0
          %v409 = vadd.f32 0.0, %v408
          %v410 = vpop.f32.mrf.mxu0
          %411 = vdwg.mxu0
          %v412 = vld [vmem:[#allocation7] sm:$0xff]
          %v413 = vld [vmem:[#allocation7 + $0x8] sm:$0xff]
          %v414 = vld [vmem:[#allocation7 + $0x10] sm:$0xff]
          %v415 = vld [vmem:[#allocation7 + $0x18] sm:$0xff]
          %v416 = vld [vmem:[#allocation7 + $0x20] sm:$0xff]
          %v417 = vld [vmem:[#allocation7 + $0x28] sm:$0xff]
          %v418 = vld [vmem:[#allocation7 + $0x30] sm:$0xff]
          %v419 = vld [vmem:[#allocation7 + $0x38] sm:$0xff]
          %v420 = vld [vmem:[#allocation7 + $0x40] sm:$0xff]
          %v421 = vld [vmem:[#allocation7 + $0x48] sm:$0xff]
          %v422 = vld [vmem:[#allocation7 + $0x50] sm:$0xff]
          %v423 = vld [vmem:[#allocation7 + $0x58] sm:$0xff]
          %v424 = vld [vmem:[#allocation7 + $0x60] sm:$0xff]
          %v425 = vld [vmem:[#allocation7 + $0x68] sm:$0xff]
          %v426 = vld [vmem:[#allocation7 + $0x70] sm:$0xff]
          %v427 = vld [vmem:[#allocation7 + $0x78] sm:$0xff]
          %v428 = vld [vmem:[%s2] sm:$0x1]
          %v430 = vlaneseq
          %v431 = vshrl.u32 %v430, 7
          %v432 = vsub.s32 0, %v431
          %v433 = vrot.slane %v428, %v432
          %435 = vmatprep.subr.mxu0 0.0
          %436 = vmatpush1.msra.mxu0 %v427
          %437 = vmatprep.subr.mxu0 0.0
          %438 = vmatpush1.msra.mxu0 %v426
          %439 = vmatprep.subr.mxu0 0.0
          %440 = vmatpush1.msra.mxu0 %v425
          %441 = vmatprep.subr.mxu0 0.0
          %442 = vmatpush1.msra.mxu0 %v424
          %443 = vmatprep.subr.mxu0 0.0
          %444 = vmatpush1.msra.mxu0 %v423
          %445 = vmatprep.subr.mxu0 0.0
          %446 = vmatpush1.msra.mxu0 %v422
          %447 = vmatprep.subr.mxu0 0.0
          %448 = vmatpush1.msra.mxu0 %v421
          %449 = vmatprep.subr.mxu0 0.0
          %450 = vmatpush1.msra.mxu0 %v420
          %451 = vmatprep.subr.mxu0 0.0
          %452 = vmatpush1.msra.mxu0 %v419
          %453 = vmatprep.subr.mxu0 0.0
          %454 = vmatpush1.msra.mxu0 %v418
          %455 = vmatprep.subr.mxu0 0.0
          %456 = vmatpush1.msra.mxu0 %v417
          %457 = vmatprep.subr.mxu0 0.0
          %458 = vmatpush1.msra.mxu0 %v416
          %459 = vmatprep.subr.mxu0 0.0
          %460 = vmatpush1.msra.mxu0 %v415
          %461 = vmatprep.subr.mxu0 0.0
          %462 = vmatpush1.msra.mxu0 %v414
          %463 = vmatprep.subr.mxu0 0.0
          %464 = vmatpush1.msra.mxu0 %v413
          %465 = vmatprep.subr.mxu0 0.0
          %466 = vmatpush1.msra.mxu0 %v412
          %467 = vmatprep.subr.mxu0 0.0
          %468 = vmatpush2.msra.mxu0 0.0
          %469 = vmatprep.subr.mxu0 0.0
          %470 = vmatpush2.msra.mxu0 0.0
          %471 = vmatprep.subr.mxu0 0.0
          %472 = vmatpush2.msra.mxu0 0.0
          %473 = vmatprep.subr.mxu0 0.0
          %474 = vmatpush2.msra.mxu0 0.0
          %475 = vmatprep.subr.mxu0 0.0
          %476 = vmatpush2.msra.mxu0 0.0
          %477 = vmatprep.subr.mxu0 0.0
          %478 = vmatpush2.msra.mxu0 0.0
          %479 = vmatprep.subr.mxu0 0.0
          %480 = vmatpush2.msra.mxu0 0.0
          %481 = vmatprep.subr.mxu0 0.0
          %482 = vmatpush2.msra.mxu0 0.0
          %483 = vmatprep.subr.mxu0 0.0
          %484 = vmatpush2.msra.mxu0 0.0
          %485 = vmatprep.subr.mxu0 0.0
          %486 = vmatpush2.msra.mxu0 0.0
          %487 = vmatprep.subr.mxu0 0.0
          %488 = vmatpush2.msra.mxu0 0.0
          %489 = vmatprep.subr.mxu0 0.0
          %490 = vmatpush2.msra.mxu0 0.0
          %491 = vmatprep.subr.mxu0 0.0
          %492 = vmatpush2.msra.mxu0 0.0
          %493 = vmatprep.subr.mxu0 0.0
          %494 = vmatpush2.msra.mxu0 0.0
          %495 = vmatprep.subr.mxu0 0.0
          %496 = vmatpush2.msra.mxu0 0.0
          %497 = vmatprep.subr.mxu0 0.0
          %498 = vmatpush2.msra.mxu0 0.0
          %499 = vmatprep.mubr.f32.mxu0 0.0
          %500 = vmatmul.mubr.f32.gmra.mxu0 %v409
          %v501 = vpop.f32.mrf.mxu0
          %v502 = vadd.f32 %v433, %v501
          %v503 = vpop.f32.mrf.mxu0
          %504 = vdwg.mxu0
          %v505 = vmax.f32 %v502, 0.0
          %v506 = vld [vmem:[#allocation9] sm:$0xff]
          %v507 = vld [vmem:[#allocation9 + $0x8] sm:$0xff]
          %v508 = vld [vmem:[#allocation9 + $0x10] sm:$0xff]
          %v509 = vld [vmem:[#allocation9 + $0x18] sm:$0xff]
          %v510 = vld [vmem:[#allocation9 + $0x20] sm:$0xff]
          %v511 = vld [vmem:[#allocation9 + $0x28] sm:$0xff]
          %v512 = vld [vmem:[#allocation9 + $0x30] sm:$0xff]
          %v513 = vld [vmem:[#allocation9 + $0x38] sm:$0xff]
          %v514 = vld [vmem:[#allocation9 + $0x40] sm:$0xff]
          %v515 = vld [vmem:[#allocation9 + $0x48] sm:$0xff]
          %v516 = vld [vmem:[#allocation9 + $0x50] sm:$0xff]
          %v517 = vld [vmem:[#allocation9 + $0x58] sm:$0xff]
          %v518 = vld [vmem:[#allocation9 + $0x60] sm:$0xff]
          %v519 = vld [vmem:[#allocation9 + $0x68] sm:$0xff]
          %v520 = vld [vmem:[#allocation9 + $0x70] sm:$0xff]
          %v521 = vld [vmem:[#allocation9 + $0x78] sm:$0xff]
          %522 = vmatprep.subr.mxu0 0.0
          %523 = vmatpush1.msra.mxu0 %v521
          %524 = vmatprep.subr.mxu0 0.0
          %525 = vmatpush1.msra.mxu0 %v520
          %526 = vmatprep.subr.mxu0 0.0
          %527 = vmatpush1.msra.mxu0 %v519
          %528 = vmatprep.subr.mxu0 0.0
          %529 = vmatpush1.msra.mxu0 %v518
          %530 = vmatprep.subr.mxu0 0.0
          %531 = vmatpush1.msra.mxu0 %v517
          %532 = vmatprep.subr.mxu0 0.0
          %533 = vmatpush1.msra.mxu0 %v516
          %534 = vmatprep.subr.mxu0 0.0
          %535 = vmatpush1.msra.mxu0 %v515
          %536 = vmatprep.subr.mxu0 0.0
          %537 = vmatpush1.msra.mxu0 %v514
          %538 = vmatprep.subr.mxu0 0.0
          %539 = vmatpush1.msra.mxu0 %v513
          %540 = vmatprep.subr.mxu0 0.0
          %541 = vmatpush1.msra.mxu0 %v512
          %542 = vmatprep.subr.mxu0 0.0
          %543 = vmatpush1.msra.mxu0 %v511
          %544 = vmatprep.subr.mxu0 0.0
          %545 = vmatpush1.msra.mxu0 %v510
          %546 = vmatprep.subr.mxu0 0.0
          %547 = vmatpush1.msra.mxu0 %v509
          %548 = vmatprep.subr.mxu0 0.0
          %549 = vmatpush1.msra.mxu0 %v508
          %550 = vmatprep.subr.mxu0 0.0
          %551 = vmatpush1.msra.mxu0 %v507
          %552 = vmatprep.subr.mxu0 0.0
          %553 = vmatpush1.msra.mxu0 %v506
          %554 = vmatprep.subr.mxu0 0.0
          %555 = vmatpush2.msra.mxu0 0.0
          %556 = vmatprep.subr.mxu0 0.0
          %557 = vmatpush2.msra.mxu0 0.0
          %558 = vmatprep.subr.mxu0 0.0
          %559 = vmatpush2.msra.mxu0 0.0
          %560 = vmatprep.subr.mxu0 0.0
          %561 = vmatpush2.msra.mxu0 0.0
          %562 = vmatprep.subr.mxu0 0.0
          %563 = vmatpush2.msra.mxu0 0.0
          %564 = vmatprep.subr.mxu0 0.0
          %565 = vmatpush2.msra.mxu0 0.0
          %566 = vmatprep.subr.mxu0 0.0
          %567 = vmatpush2.msra.mxu0 0.0
          %568 = vmatprep.subr.mxu0 0.0
          %569 = vmatpush2.msra.mxu0 0.0
          %570 = vmatprep.subr.mxu0 0.0
          %571 = vmatpush2.msra.mxu0 0.0
          %572 = vmatprep.subr.mxu0 0.0
          %573 = vmatpush2.msra.mxu0 0.0
          %574 = vmatprep.subr.mxu0 0.0
          %575 = vmatpush2.msra.mxu0 0.0
          %576 = vmatprep.subr.mxu0 0.0
          %577 = vmatpush2.msra.mxu0 0.0
          %578 = vmatprep.subr.mxu0 0.0
          %579 = vmatpush2.msra.mxu0 0.0
          %580 = vmatprep.subr.mxu0 0.0
          %581 = vmatpush2.msra.mxu0 0.0
          %582 = vmatprep.subr.mxu0 0.0
          %583 = vmatpush2.msra.mxu0 0.0
          %584 = vmatprep.subr.mxu0 0.0
          %585 = vmatpush2.msra.mxu0 0.0
          %586 = vmatprep.mubr.f32.mxu0 0.0
          %587 = vmatmul.mubr.f32.gmra.mxu0 %v505
          %v588 = vpop.f32.mrf.mxu0
          %v589 = vadd.f32 0.0, %v588
          %v590 = vpop.f32.mrf.mxu0
          %591 = vdwg.mxu0
          %s592 = scalar_lea.vmem [#allocation2], %s331
          %593 = vst [vmem:[%s592] sm:$0xff] %v589
          %s594 = scalar_lea.vmem [#allocation3], %s331
          %595 = vst.msk [vmem:[%s594] sm:$0xff] %vm338, %v336
        $region64: #{tpu_custom_call.1} parent=43 // pred_fallthru
          _
        %p596 = scmp.eq.s32.totalorder %s27, 1
        // Predicated region
        $region65: #{tpu_custom_call.1} parent=43 // pred_check
          %p597 = pneg %p596
        $region66: #{tpu_custom_call.1} parent=43 // pred_check_branch
          %599 = sbr.rel (%p597) target = $region68
        $region67: #{tpu_custom_call.1} parent=43 // pred_region
          %s600 = scalar_lea.vmem [#allocation3], %s331
          %v601 = vld [vmem:[%s600] sm:$0xff]
          %v602 = vld [vmem:[#allocation2] sm:$0xff]
          %v603 = vld [vmem:[#allocation10] sm:$0x1]
          %v605 = vlaneseq
          %v606 = vshrl.u32 %v605, 7
          %v607 = vsub.s32 0, %v606
          %v608 = vrot.slane %v603, %v607
          %vm610 = vcmask 64512
          %v612 = vsel %vm610, %v601, 0
          %614 = vmatprep.subr.mxu0 0.0
          %615 = vmatpush1.msra.mxu0 0.0
          %616 = vmatprep.subr.mxu0 0.0
          %617 = vmatpush1.msra.mxu0 0.0
          %618 = vmatprep.subr.mxu0 0.0
          %619 = vmatpush1.msra.mxu0 0.0
          %620 = vmatprep.subr.mxu0 0.0
          %621 = vmatpush1.msra.mxu0 0.0
          %622 = vmatprep.subr.mxu0 0.0
          %623 = vmatpush1.msra.mxu0 0.0
          %624 = vmatprep.subr.mxu0 0.0
          %625 = vmatpush1.msra.mxu0 0.0
          %626 = vmatprep.subr.mxu0 0.0
          %627 = vmatpush1.msra.mxu0 0.0
          %628 = vmatprep.subr.mxu0 0.0
          %629 = vmatpush1.msra.mxu0 0.0
          %630 = vmatprep.subr.mxu0 0.0
          %631 = vmatpush1.msra.mxu0 0.0
          %632 = vmatprep.subr.mxu0 0.0
          %633 = vmatpush1.msra.mxu0 0.0
          %634 = vmatprep.subr.mxu0 0.0
          %635 = vmatpush1.msra.mxu0 0.0
          %636 = vmatprep.subr.mxu0 0.0
          %637 = vmatpush1.msra.mxu0 0.0
          %638 = vmatprep.subr.mxu0 0.0
          %639 = vmatpush1.msra.mxu0 0.0
          %640 = vmatprep.subr.mxu0 0.0
          %641 = vmatpush1.msra.mxu0 0.0
          %642 = vmatprep.subr.mxu0 0.0
          %643 = vmatpush1.msra.mxu0 0.0
          %644 = vmatprep.subr.mxu0 0.0
          %645 = vmatpush1.msra.mxu0 %v602
          %646 = vmatprep.subr.mxu0 0.0
          %647 = vmatpush2.msra.mxu0 0.0
          %648 = vmatprep.subr.mxu0 0.0
          %649 = vmatpush2.msra.mxu0 0.0
          %650 = vmatprep.subr.mxu0 0.0
          %651 = vmatpush2.msra.mxu0 0.0
          %652 = vmatprep.subr.mxu0 0.0
          %653 = vmatpush2.msra.mxu0 0.0
          %654 = vmatprep.subr.mxu0 0.0
          %655 = vmatpush2.msra.mxu0 0.0
          %656 = vmatprep.subr.mxu0 0.0
          %657 = vmatpush2.msra.mxu0 0.0
          %658 = vmatprep.subr.mxu0 0.0
          %659 = vmatpush2.msra.mxu0 0.0
          %660 = vmatprep.subr.mxu0 0.0
          %661 = vmatpush2.msra.mxu0 0.0
          %662 = vmatprep.subr.mxu0 0.0
          %663 = vmatpush2.msra.mxu0 0.0
          %664 = vmatprep.subr.mxu0 0.0
          %665 = vmatpush2.msra.mxu0 0.0
          %666 = vmatprep.subr.mxu0 0.0
          %667 = vmatpush2.msra.mxu0 0.0
          %668 = vmatprep.subr.mxu0 0.0
          %669 = vmatpush2.msra.mxu0 0.0
          %670 = vmatprep.subr.mxu0 0.0
          %671 = vmatpush2.msra.mxu0 0.0
          %672 = vmatprep.subr.mxu0 0.0
          %673 = vmatpush2.msra.mxu0 0.0
          %674 = vmatprep.subr.mxu0 0.0
          %675 = vmatpush2.msra.mxu0 0.0
          %676 = vmatprep.subr.mxu0 0.0
          %677 = vmatpush2.msra.mxu0 0.0
          %678 = vmatprep.mubr.f32.mxu0 0.0
          %679 = vmatmul.mubr.f32.gmra.mxu0 %v612
          %v680 = vpop.f32.mrf.mxu0
          %v681 = vadd.f32 %v608, %v680
          %v682 = vpop.f32.mrf.mxu0
          %683 = vdwg.mxu0
          %684 = vst [vmem:[%s321] sm:$0xff] %v681
        $region68: #{tpu_custom_call.1} parent=43 // pred_fallthru
          _
        %s685 = sand.u32 %s180, 1
        %s686 = scalar_lea.sflag [#allocation6], %s685
        %s687 = sand.u32 %s180, 1
        %s688 = smul.addr %s687, 8
        %s689 = scalar_lea.vmem [#allocation12], %s688
        // Predicated region
        $region69: #{tpu_custom_call.1} parent=43 // pred_check
          %p690 = pneg %p190
        $region70: #{tpu_custom_call.1} parent=43 // pred_check_branch
          %692 = sbr.rel (%p690) target = $region72
        $region71: #{tpu_custom_call.1} parent=43 // pred_region
          %s693 = smul.u32 %s27, %s28
          %s695 = ssub.s32 128, 128
          %696 = vsyncadd %s686, %s695
          %s697 = smul.addr %s693, 128
          %s698 = scalar_lea.hbm %s6, %s697
          %s700 = sshll.u32 %s689, 4
          %s701 = int_to_ptr.vmem [resolvable:$true] %s700
          %703 = dma.vmem_to_hbm [thread:$0]  %s701, 128, %s698, %s686
        $region72: #{tpu_custom_call.1} parent=43 // pred_fallthru
          _
      $region44: #{tpu_custom_call.1} parent=5 // pred_fallthru
        _
      %p704 = scmp.le.s32.totalorder 2, %s18
      // Predicated region
      $region73: #{tpu_custom_call.1} parent=5 // pred_check
        %p705 = pneg %p704
      $region74: #{tpu_custom_call.1} parent=5 // pred_check_branch
        %707 = sbr.rel (%p705) target = $region76
      $region75: #{tpu_custom_call.1} parent=5 // pred_region
        %s708 = ssub.s32 %s18, 2
        // Predicated region
        $region77: #{tpu_custom_call.1} parent=75 // pred_check
          %p709 = pneg %p196
        $region78: #{tpu_custom_call.1} parent=75 // pred_check_branch
          %711 = sbr.rel (%p709) target = $region80
        $region79: #{tpu_custom_call.1} parent=75 // pred_region
          %s712 = sand.u32 %s181, 1
          %s713 = scalar_lea.sflag [#allocation6], %s712
          %s714 = sand.u32 %s181, 1
          %s715 = smul.addr %s714, 8
          %s716 = scalar_lea.vmem [#allocation12], %s715
          %717 = dma.done %s713, 128
        $region80: #{tpu_custom_call.1} parent=75 // pred_fallthru
          _
      $region76: #{tpu_custom_call.1} parent=5 // pred_fallthru
        _
    $region6: #{tpu_custom_call.1} parent=1 // loop_footer
      %s22 = sadd.s32 1, %s18
    $region7: #{tpu_custom_call.1} parent=1 // loop_footer_branch
      %17 = sbr.rel target = $region3
    $region8: #{tpu_custom_call.1} parent=1 // loop_exit
      _
    %718 = vsyncpa [#allocation5], 1
    %s719 = scalar_lea.sflag [#allocation5], 1
    %720 = vsyncpa %s719, 1
    %721 = vsyncpa [#allocation8], 1
    %722 = vsyncpa [#allocation11], 1
    %723 = vsyncpa [#allocation6], 1
    %s724 = scalar_lea.sflag [#allocation6], 1
    %725 = vsyncpa %s724, 1

</llo_original>
